<compile_context>
chip_gen: v7x
topology: tpu7x:2x2x1
jax: 0.10.0
libtpu: 0.0.40
codegen_flags: <defaults>
</compile_context>

<pallas_src>
import jax
import jax.numpy as jnp
import numpy as np
from jax import lax
from jax.experimental import pallas as pl
from jax.experimental.pallas import tpu as pltpu

BN_EPS = 1e-5
LEAKY_SLOPE = 0.2


def _project_kernel(embed_ref, w_ref, params_ref, y_ref):
    """Linear -> BatchNorm1d (training-mode batch stats) -> LeakyReLU(0.2).

    params_ref is (3, P): row 0 = bias, row 1 = gamma, row 2 = beta.
    Runs once over the whole batch (full-batch BN statistics).
    """
    proj = jnp.dot(embed_ref[...], w_ref[...],
                   preferred_element_type=jnp.float32) + params_ref[0:1, :]
    mean = jnp.mean(proj, axis=0, keepdims=True)
    var = jnp.mean(jnp.square(proj - mean), axis=0, keepdims=True)
    # Fold BN + affine into one multiply-add: y = proj * scale + shift.
    scale = params_ref[1:2, :] * lax.rsqrt(var + BN_EPS)
    shift = params_ref[2:3, :] - mean * scale
    y = proj * scale + shift
    y_ref[...] = jnp.where(y >= 0, y, LEAKY_SLOPE * y).astype(y_ref.dtype)


def _concat_kernel(inp_ref, y_ref, rep_ref, out_ref):
    """out block = [ inp block | y block @ R ]   (flattened-NCHW lane split).

    inp_ref : (TILE_N, C*HW)    pass-through half (dominates bytes)
    y_ref   : (TILE_N, P)       projected embedding rows for this tile
    rep_ref : (P, P*HW)         0/1 replication matrix, resident across steps
    out_ref : (TILE_N, (C+P)*HW)
    """
    c_flat = inp_ref.shape[-1]
    # Pass-through half: direct lane-dense store, no concat temporary.
    out_ref[:, :c_flat] = inp_ref[...]
    # Replicated-embedding half: each of the P values repeated HW times along
    # lanes via a tiny MXU matmul (avoids any cross-lane relayout/reshape).
    rep = jnp.dot(y_ref[...], rep_ref[...], preferred_element_type=jnp.float32)
    out_ref[:, c_flat:] = rep.astype(out_ref.dtype)


def concat_embed_forward(inp_nchw, embed, w_t, b, gamma, beta):
    """inp_nchw: (N, C, 4, 4) NCHW (matches the PyTorch module).
       embed:    (N, E).
       w_t:      (E, P) = Linear.weight.T,  b/gamma/beta: (P,).
       returns:  (N, C+P, 4, 4) NCHW."""
    n, c, h, w = inp_nchw.shape
    e, p = w_t.shape
    assert (h, w) == (4, 4), "Concat_embed replicates over a fixed 4x4 grid"
    hw = h * w

    # ---- kernel 1: projection over the full batch (tiny, ungridded) --------
    params = jnp.stack([b, gamma, beta]).astype(jnp.float32)      # (3, P)
    y = pl.pallas_call(
        _project_kernel,
        out_shape=jax.ShapeDtypeStruct((n, p), jnp.float32),
        in_specs=[pl.BlockSpec(memory_space=pltpu.MemorySpace.VMEM)] * 3,
        out_specs=pl.BlockSpec(memory_space=pltpu.MemorySpace.VMEM),
    )(embed.astype(jnp.float32), w_t.astype(jnp.float32), params)

    # ---- kernel 2: copy + broadcast concat, gridded over the batch ----------
    # Free reshape (NCHW is contiguous): no XLA transposes, and the channel
    # concat becomes a contiguous lane split at offset C*HW (a multiple of 128
    # whenever C is a multiple of 8 -> unmasked lane-dense stores).
    inp_flat = inp_nchw.reshape(n, c * hw)
    # Replication matrix R[q, q*hw + s] = 1  =>  (y @ R)[:, q*hw + s] = y[:, q]
    rep_mat = jnp.repeat(jnp.eye(p, dtype=jnp.float32), hw, axis=1)  # (P, P*HW)

    # Tile the batch so DMA double-buffers against the trivial compute; keep
    # the double-buffered working set <= ~12 MiB so it fits scoped-VMEM
    # defaults on v5e (16 MiB) and v7x (32 MiB scoped / 64 MiB physical).
    bytes_per_row = 4 * (c * hw + p + (c + p) * hw)
    vmem_budget = 12 * 1024 * 1024
    cand = max(8, (vmem_budget // (2 * bytes_per_row)) // 8 * 8)
    tile_n = min(n, cand)                      # tile_n == n or a multiple of 8

    out_flat = pl.pallas_call(
        _concat_kernel,
        out_shape=jax.ShapeDtypeStruct((n, (c + p) * hw), inp_nchw.dtype),
        grid_spec=pltpu.PrefetchScalarGridSpec(
            num_scalar_prefetch=0,
            grid=(pl.cdiv(n, tile_n),),
            in_specs=[
                pl.BlockSpec((tile_n, c * hw), lambda i: (i, 0)),
                pl.BlockSpec((tile_n, p), lambda i: (i, 0)),
                pl.BlockSpec((p, p * hw), lambda i: (0, 0)),   # stays resident
            ],
            out_specs=pl.BlockSpec((tile_n, (c + p) * hw), lambda i: (i, 0)),
        ),
        compiler_params=pltpu.CompilerParams(
            dimension_semantics=("parallel",),       # shard over 2 TCs on v7x
            vmem_limit_bytes=32 * 1024 * 1024),
    )(inp_flat, y, rep_mat)

    # Free reshape back to NCHW.
    return out_flat.reshape(n, c + p, h, w)


def _reference(inp_nchw, embed, w_t, b, gamma, beta):
    """Pure-JAX reference mirroring the PyTorch forward."""
    proj = embed @ w_t + b
    mean = proj.mean(0, keepdims=True)
    var = ((proj - mean) ** 2).mean(0, keepdims=True)
    y = gamma * (proj - mean) / jnp.sqrt(var + BN_EPS) + beta
    y = jnp.where(y >= 0, y, LEAKY_SLOPE * y)
    rep = jnp.broadcast_to(y[:, :, None, None], (*y.shape, 4, 4))
    return jnp.concatenate([inp_nchw, rep], axis=1)


if __name__ == "__main__":
    # Small deterministic setup:
    #   batch N=2, inp channels C=8, spatial 4x4 (fixed by the module),
    #   embed_dim E=32, projected_embed_dim P=16.
    N, C, H, W = 2, 8, 4, 4
    E, P = 32, 16

    key = jax.random.PRNGKey(0)
    k_inp, k_emb, k_w, k_b, k_g, k_be = jax.random.split(key, 6)

    inp = jax.random.normal(k_inp, (N, C, H, W), dtype=jnp.float32)
    embed = jax.random.normal(k_emb, (N, E), dtype=jnp.float32)

    # Deterministic synthetic parameters (shapes from nn.Linear / BatchNorm1d).
    w_t = jax.random.normal(k_w, (E, P), dtype=jnp.float32) / np.sqrt(E)
    b = jax.random.normal(k_b, (P,), dtype=jnp.float32) * 0.1
    gamma = 1.0 + 0.1 * jax.random.normal(k_g, (P,), dtype=jnp.float32)
    beta = 0.1 * jax.random.normal(k_be, (P,), dtype=jnp.float32)

    out = concat_embed_forward(inp, embed, w_t, b, gamma, beta)
    out = jax.block_until_ready(out)

    ref = _reference(inp, embed, w_t, b, gamma, beta)
    assert out.shape == (N, C + P, H, W), out.shape
    np.testing.assert_allclose(np.asarray(out), np.asarray(ref),
                               rtol=1e-5, atol=1e-5)
    print("KERNEL_OK")
</pallas_src>

<mosaic_0001>
module attributes {stable_mosaic.version = 11 : i64} {
  func.func @_project_kernel(%arg0: memref<2x32xf32, #tpu.memory_space<vmem>>, %arg1: memref<32x16xf32, #tpu.memory_space<vmem>>, %arg2: memref<3x16xf32, #tpu.memory_space<vmem>>, %arg3: memref<2x16xf32, #tpu.memory_space<vmem>>) attributes {dimension_semantics = [], scalar_prefetch = 0 : i64, scratch_operands = 0 : i64, tpu.core_type = #tpu.core_type<tc>} {
    %c0 = arith.constant 0 : index
    %c0_0 = arith.constant 0 : index
    %0 = vector.load %arg0[%c0, %c0_0] : memref<2x32xf32, #tpu.memory_space<vmem>>, vector<2x32xf32>
    %c0_1 = arith.constant 0 : index
    %c0_2 = arith.constant 0 : index
    %1 = vector.load %arg1[%c0_1, %c0_2] : memref<32x16xf32, #tpu.memory_space<vmem>>, vector<32x16xf32>
    %cst = arith.constant dense<0.000000e+00> : vector<2x16xf32>
    %2 = tpu.matmul %0, %1, %cst {dimension_numbers = #tpu.dot_dimension_numbers<[1], [0], [0], [1], [0, 0, 1, 1], [], []>} : vector<2x32xf32>, vector<32x16xf32>, vector<2x16xf32> -> vector<2x16xf32>
    %c0_3 = arith.constant 0 : index
    %c0_4 = arith.constant 0 : index
    %3 = vector.load %arg2[%c0_3, %c0_4] : memref<3x16xf32, #tpu.memory_space<vmem>>, vector<1x16xf32>
    %4 = vector.broadcast %3 : vector<1x16xf32> to vector<2x16xf32>
    %5 = arith.addf %2, %4 : vector<2x16xf32>
    %cst_5 = arith.constant dense<0.000000e+00> : vector<16xf32>
    %6 = vector.multi_reduction <add>, %5, %cst_5 [0] : vector<2x16xf32> to vector<16xf32>
    %7 = vector.shape_cast %6 : vector<16xf32> to vector<1x16xf32>
    %cst_6 = arith.constant 2.000000e+00 : f32
    %8 = vector.broadcast %cst_6 : f32 to vector<1x16xf32>
    %9 = arith.divf %7, %8 : vector<1x16xf32>
    %10 = vector.broadcast %9 : vector<1x16xf32> to vector<2x16xf32>
    %11 = arith.subf %5, %10 : vector<2x16xf32>
    %12 = arith.mulf %11, %11 : vector<2x16xf32>
    %cst_7 = arith.constant dense<0.000000e+00> : vector<16xf32>
    %13 = vector.multi_reduction <add>, %12, %cst_7 [0] : vector<2x16xf32> to vector<16xf32>
    %14 = vector.shape_cast %13 : vector<16xf32> to vector<1x16xf32>
    %cst_8 = arith.constant 2.000000e+00 : f32
    %15 = vector.broadcast %cst_8 : f32 to vector<1x16xf32>
    %16 = arith.divf %14, %15 : vector<1x16xf32>
    %c1 = arith.constant 1 : index
    %c0_9 = arith.constant 0 : index
    %17 = vector.load %arg2[%c1, %c0_9] : memref<3x16xf32, #tpu.memory_space<vmem>>, vector<1x16xf32>
    %cst_10 = arith.constant 9.99999974E-6 : f32
    %18 = vector.broadcast %cst_10 : f32 to vector<1x16xf32>
    %19 = arith.addf %16, %18 : vector<1x16xf32>
    %20 = math.rsqrt %19 : vector<1x16xf32>
    %21 = arith.mulf %17, %20 : vector<1x16xf32>
    %c2 = arith.constant 2 : index
    %c0_11 = arith.constant 0 : index
    %22 = vector.load %arg2[%c2, %c0_11] : memref<3x16xf32, #tpu.memory_space<vmem>>, vector<1x16xf32>
    %23 = arith.mulf %9, %21 : vector<1x16xf32>
    %24 = arith.subf %22, %23 : vector<1x16xf32>
    %25 = vector.broadcast %21 : vector<1x16xf32> to vector<2x16xf32>
    %26 = arith.mulf %5, %25 : vector<2x16xf32>
    %27 = vector.broadcast %24 : vector<1x16xf32> to vector<2x16xf32>
    %28 = arith.addf %26, %27 : vector<2x16xf32>
    %cst_12 = arith.constant 0.000000e+00 : f32
    %29 = vector.broadcast %cst_12 : f32 to vector<2x16xf32>
    %30 = arith.cmpf oge, %28, %29 : vector<2x16xf32>
    %cst_13 = arith.constant 2.000000e-01 : f32
    %31 = vector.broadcast %cst_13 : f32 to vector<2x16xf32>
    %32 = arith.mulf %31, %28 : vector<2x16xf32>
    %33 = arith.select %30, %28, %32 : vector<2x16xi1>, vector<2x16xf32>
    %c0_14 = arith.constant 0 : index
    %c0_15 = arith.constant 0 : index
    %34 = vector.load %arg3[%c0_14, %c0_15] : memref<2x16xf32, #tpu.memory_space<vmem>>, vector<2x16xf32>
    tpu.vector_store %arg3[%c0_14, %c0_15], %33 {strides = array<i32>} : memref<2x16xf32, #tpu.memory_space<vmem>>, vector<2x16xf32>,
    return
  }
}

</mosaic_0001>

<llo_original>
// kernel: tpu_custom_call.1
$region0: #{tpu_custom_call.1}
  #allocation0 [shape = 'u32[]', space=smem, size = 0x4, offset = 0x4, fixed_abs, tag = 'smem constant byte address 0x4 - core index']
  #allocation1 [shape = 'u32[144,128]{1,0:T(1,128)}', space=vmem, size = 0x12000, scoped, tag = 'internal scratch']
  %s0 = inlined_call_operand.vmem [shape: f32[2,32], index: 0, kind: input, shape index: {}]
  %s1 = inlined_call_operand.vmem [shape: f32[32,16], index: 1, kind: input, shape index: {}]
  %s2 = inlined_call_operand.vmem [shape: f32[3,16], index: 2, kind: input, shape index: {}]
  %s3 = inlined_call_operand.hbm [shape: f32[2,16], index: 3, kind: output, shape index: {}]
  %s4 = sld [smem:[#allocation0]]
  $region22: #{tpu_custom_call.1} parent=0
    _
  %s6 = ssub.s32 1, %s4
  %s7 = scalar_select 0, %s6, %s4
  $region1: #{tpu_custom_call.1} parent=0
    #allocation2 [shape = 'u8[1024]{0}', space=vmem, size = 0x400, scoped, tag = 'output window, operand 0, single buffered']
    #allocation3 [shape = 's32[1]{0}', space=sflag, size = 0x4, scoped, tag = 'scoped memory for tpu_custom_call.1']
    %8 = vsyncpa [#allocation3], 0
    // Predicated region
    $region2: #{tpu_custom_call.1} parent=1 // pred_check
      _
    $region3: #{tpu_custom_call.1} parent=1 // pred_check_branch
      %10 = sbr.rel (0) target = $region5
    $region4: #{tpu_custom_call.1} parent=1 // pred_region
      _
    $region5: #{tpu_custom_call.1} parent=1 // pred_fallthru
      _
    // Predicated region
    $region6: #{tpu_custom_call.1} parent=1 // pred_check
      _
    $region7: #{tpu_custom_call.1} parent=1 // pred_check_branch
      %12 = sbr.rel (0) target = $region9
    $region8: #{tpu_custom_call.1} parent=1 // pred_region
      _
    $region9: #{tpu_custom_call.1} parent=1 // pred_fallthru
      _
    // Predicated region
    $region10: #{tpu_custom_call.1} parent=1 // pred_check
      _
    $region11: #{tpu_custom_call.1} parent=1 // pred_check_branch
      %14 = sbr.rel (0) target = $region13
    $region12: #{tpu_custom_call.1} parent=1 // pred_region
      _
    $region13: #{tpu_custom_call.1} parent=1 // pred_fallthru
      _
    %v15 = vld [vmem:[%s0] sm:$0x3]
    %v16 = vld [vmem:[%s1] sm:$0xff]
    %v17 = vld [vmem:[%s1 + $0x8] sm:$0xff]
    %v18 = vld [vmem:[%s1 + $0x10] sm:$0xff]
    %v19 = vld [vmem:[%s1 + $0x18] sm:$0xff]
    %v20 = vld [vmem:[%s2] sm:$0x1]
    %v21 = vlaneseq
    %v22 = vshrl.u32 %v21, 7
    %v23 = vsub.s32 0, %v22
    %v24 = vrot.slane %v20, %v23
    %vm25 = vcmask 261120
    %v27 = vsel %vm25, %v15, 0
    %29 = vmatprep.subr.mxu0 0.0
    %30 = vmatpush1.msra.mxu0 %v16
    %31 = vmatprep.subr.mxu0 0.0
    %32 = vmatpush1.msra.mxu0 %v17
    %33 = vmatprep.subr.mxu0 0.0
    %34 = vmatpush1.msra.mxu0 %v18
    %35 = vmatprep.subr.mxu0 0.0
    %36 = vmatpush1.msra.mxu0 %v19
    %37 = vmatprep.subr.mxu0 0.0
    %38 = vmatpush1.msra.mxu0 0.0
    %39 = vmatprep.subr.mxu0 0.0
    %40 = vmatpush1.msra.mxu0 0.0
    %41 = vmatprep.subr.mxu0 0.0
    %42 = vmatpush1.msra.mxu0 0.0
    %43 = vmatprep.subr.mxu0 0.0
    %44 = vmatpush1.msra.mxu0 0.0
    %45 = vmatprep.subr.mxu0 0.0
    %46 = vmatpush1.msra.mxu0 0.0
    %47 = vmatprep.subr.mxu0 0.0
    %48 = vmatpush1.msra.mxu0 0.0
    %49 = vmatprep.subr.mxu0 0.0
    %50 = vmatpush1.msra.mxu0 0.0
    %51 = vmatprep.subr.mxu0 0.0
    %52 = vmatpush1.msra.mxu0 0.0
    %53 = vmatprep.subr.mxu0 0.0
    %54 = vmatpush1.msra.mxu0 0.0
    %55 = vmatprep.subr.mxu0 0.0
    %56 = vmatpush1.msra.mxu0 0.0
    %57 = vmatprep.subr.mxu0 0.0
    %58 = vmatpush1.msra.mxu0 0.0
    %59 = vmatprep.subr.mxu0 0.0
    %60 = vmatpush1.msra.mxu0 0.0
    %61 = vmatprep.subr.mxu0 0.0
    %62 = vmatpush1.msra.mxu0 0.0
    %63 = vmatprep.subr.mxu0 0.0
    %64 = vmatpush1.msra.mxu0 0.0
    %65 = vmatprep.subr.mxu0 0.0
    %66 = vmatpush1.msra.mxu0 0.0
    %67 = vmatprep.subr.mxu0 0.0
    %68 = vmatpush1.msra.mxu0 0.0
    %69 = vmatprep.subr.mxu0 0.0
    %70 = vmatpush1.msra.mxu0 0.0
    %71 = vmatprep.subr.mxu0 0.0
    %72 = vmatpush1.msra.mxu0 0.0
    %73 = vmatprep.subr.mxu0 0.0
    %74 = vmatpush1.msra.mxu0 0.0
    %75 = vmatprep.subr.mxu0 0.0
    %76 = vmatpush1.msra.mxu0 0.0
    %77 = vmatprep.subr.mxu0 0.0
    %78 = vmatpush1.msra.mxu0 0.0
    %79 = vmatprep.subr.mxu0 0.0
    %80 = vmatpush1.msra.mxu0 0.0
    %81 = vmatprep.subr.mxu0 0.0
    %82 = vmatpush1.msra.mxu0 0.0
    %83 = vmatprep.subr.mxu0 0.0
    %84 = vmatpush1.msra.mxu0 0.0
    %85 = vmatprep.subr.mxu0 0.0
    %86 = vmatpush1.msra.mxu0 0.0
    %87 = vmatprep.subr.mxu0 0.0
    %88 = vmatpush1.msra.mxu0 0.0
    %89 = vmatprep.subr.mxu0 0.0
    %90 = vmatpush1.msra.mxu0 0.0
    %91 = vmatprep.subr.mxu0 0.0
    %92 = vmatpush1.msra.mxu0 0.0
    %93 = vmatprep.mubr.f32.mxu0 0.0
    %94 = vmatmul.mubr.f32.gmra.mrb[0].mxu0 %v27
    %v95 = vpop.f32.mrb[0].mxu0
    %v96 = vadd.f32 %v24, %v95
    %v97 = vpop.f32.mrb[0].mxu0
    %98 = vdwg.mxu0
    %vm99 = vcmask 123904
    %v100 = vsel %vm99, %v96, 0.0
    %v101 = vrot.slane %v100, 4
    %v102 = vadd.f32 %v100, %v101
    %v103 = vrot.slane %v102, 2
    %v104 = vadd.f32 %v102, %v103
    %v105 = vrot.slane %v104, 1
    %v106 = vadd.f32 %v104, %v105
    %v107 = vrcp.pop 2.0
    %v108 = vmul.f32 %v106, %v107
    %v109 = vsub.f32 %v96, %v108
    %v110 = vmul.f32 %v109, %v109
    %v111 = vsel %vm99, %v110, 0.0
    %v112 = vrot.slane %v111, 4
    %v113 = vadd.f32 %v111, %v112
    %v114 = vrot.slane %v113, 2
    %v115 = vadd.f32 %v113, %v114
    %v116 = vrot.slane %v115, 1
    %v117 = vadd.f32 %v115, %v116
    %v118 = vmul.f32 %v117, %v107
    %v119 = vld [vmem:[%s2 + $0x1] sm:$0x1]
    %v120 = vadd.f32 %v118, 1e-05
    %v121 = vrsqrt.pop %v120
    %v122 = vmul.f32 %v119, %v121
    %v123 = vld [vmem:[%s2 + $0x2] sm:$0x1]
    %v124 = vmul.f32 %v108, %v122
    %v125 = vsub.f32 %v123, %v124
    %v126 = vlaneseq
    %v127 = vshrl.u32 %v126, 7
    %v128 = vsub.s32 0, %v127
    %v129 = vrot.slane %v122, %v128
    %v130 = vmul.f32 %v96, %v129
    %v131 = vlaneseq
    %v132 = vshrl.u32 %v131, 7
    %v133 = vsub.s32 0, %v132
    %v134 = vrot.slane %v125, %v133
    %v135 = vadd.f32 %v130, %v134
    %vm136 = vcmp.ge.f32.partialorder %v135, 0.0
    %v137 = vmul.f32 %v135, 0.2
    %v138 = vsel %vm136, %v135, %v137
    %139 = vst.msk [vmem:[#allocation2] sm:$0x3] %vm99, %v138
    // Predicated region
    $region14: #{tpu_custom_call.1} parent=1 // pred_check
      _
    $region15: #{tpu_custom_call.1} parent=1 // pred_check_branch
      %141 = sbr.rel (0) target = $region17
    $region16: #{tpu_custom_call.1} parent=1 // pred_region
      %s143 = ssub.s32 32, 32
      %144 = vsyncadd [#allocation3], %s143
      %s146 = sshll.u32 [#allocation2], 4
      %s147 = int_to_ptr.vmem [resolvable:$true] %s146
      %149 = dma.vmem_to_hbm [thread:$0]  %s147, 32, %s3, [#allocation3]
    $region17: #{tpu_custom_call.1} parent=1 // pred_fallthru
      _
    // Predicated region
    $region18: #{tpu_custom_call.1} parent=1 // pred_check
      _
    $region19: #{tpu_custom_call.1} parent=1 // pred_check_branch
      %151 = sbr.rel (0) target = $region21
    $region20: #{tpu_custom_call.1} parent=1 // pred_region
      %152 = dma.done [#allocation3], 32
    $region21: #{tpu_custom_call.1} parent=1 // pred_fallthru
      _
    %153 = vsyncpa [#allocation3], 1

</llo_original>
